<compile_context>
chip_gen: v7x
topology: tpu7x:2x2x1
jax: 0.10.0
libtpu: 0.0.40
codegen_flags: <defaults>
</compile_context>

<pallas_src>
import functools

import jax
import jax.numpy as jnp
from jax.experimental import pallas as pl
from jax.experimental.pallas import tpu as pltpu

LANE = 128                    # pad all lane (last) dims to a multiple of this
SUBLANE = 16                  # batch padding granularity (bf16 sublane packing)
TILE_B_MAX = 512              # max batch tile; multiple of 16, clamped by VMEM
VMEM_FLOOR = 16 * 1024 * 1024
VMEM_CAP = 48 * 1024 * 1024   # keep under v7x's 64 MiB per-TC VMEM


def _round_up(n, m):
    return ((n + m - 1) // m) * m


def _pad_to(a, shape):
    pads = [(0, s - d) for d, s in zip(a.shape, shape)]
    return jnp.pad(a, pads)


def tiny_mlp_kernel(x_ref, w1_ref, b1_ref, w2_ref, b2_ref, o_ref):
    # x arrives as f32; cast to bf16 in-kernel (no extra HBM round trip).
    x = x_ref[...].astype(jnp.bfloat16)
    # fc1: (tile_b, in_p) @ (in_p, hid_p) -> f32 accumulate on the MXU.
    h = jnp.dot(x, w1_ref[...], preferred_element_type=jnp.float32)
    # bias + ReLU in f32 on the VPU.
    h = jnp.maximum(h + b1_ref[...], 0.0)
    # fc2: (tile_b, hid_p) @ (hid_p, out_p) -> f32 accumulate.
    y = jnp.dot(h.astype(w2_ref.dtype), w2_ref[...],
                preferred_element_type=jnp.float32)
    o_ref[...] = (y + b2_ref[...]).astype(o_ref.dtype)


def prepare_params(w1, b1, w2, b2):
    """One-time param prep (do NOT call per forward).

    w1: (hidden, in)  b1: (hidden,)  w2: (out, hidden)  b2: (out,)
    Returns transposed, zero-padded, bf16 weights and f32 bias rows.
    Zero-padded rows/cols contribute exactly 0 through bias, ReLU and fc2,
    so semantics match the PyTorch module.
    """
    hidden_dim, in_dim = w1.shape
    out_dim = w2.shape[0]
    in_p = _round_up(in_dim, LANE)
    hid_p = _round_up(hidden_dim, LANE)
    out_p = _round_up(out_dim, LANE)

    w1_t = _pad_to(jnp.transpose(w1), (in_p, hid_p)).astype(jnp.bfloat16)
    w2_t = _pad_to(jnp.transpose(w2), (hid_p, out_p)).astype(jnp.bfloat16)
    b1_r = _pad_to(b1.reshape(1, -1), (1, hid_p)).astype(jnp.float32)
    b2_r = _pad_to(b2.reshape(1, -1), (1, out_p)).astype(jnp.float32)
    return dict(w1=w1_t, b1=b1_r, w2=w2_t, b2=b2_r,
                in_dim=in_dim, out_dim=out_dim)


def _choose_batch_tiling(B):
    """Pick (padded_batch, tile_b).

    Small B: pad only to a multiple of 16 and run one grid step.
    Large B: tile at TILE_B_MAX (>= 2 grid steps -> both v7x TCs get work).
    """
    b_pad = _round_up(max(B, SUBLANE), SUBLANE)
    if b_pad <= TILE_B_MAX:
        return b_pad, b_pad
    b_pad = _round_up(b_pad, TILE_B_MAX)
    return b_pad, TILE_B_MAX


def _vmem_limit_bytes(tile_b, in_p, hid_p, out_p, out_bytes):
    """VMEM request derived from the actual resident buffers (+ headroom)."""
    x_tiles = tile_b * in_p * 4 * 2            # f32 x tile, double-buffered
    o_tiles = tile_b * out_p * out_bytes * 2   # out tile, double-buffered
    weights = (in_p * hid_p + hid_p * out_p) * 2 * 2   # bf16, 2 bufs (auto pipeline)
    biases = (hid_p + out_p) * 4 * 2
    interm = tile_b * in_p * 2 + tile_b * hid_p * 4    # bf16 x cast + f32 h
    total = int((x_tiles + o_tiles + weights + biases + interm) * 1.5) + (1 << 20)
    return max(VMEM_FLOOR, min(total, VMEM_CAP))


@functools.partial(jax.jit, static_argnames=("tile_b", "out_dtype"))
def _forward_padded(x_p, w1, b1, w2, b2, *, tile_b, out_dtype=jnp.float32):
    # NOTE: shape-specialized; every distinct (b_pad, tile_b) retraces.
    b_pad, in_p = x_p.shape
    hid_p = w1.shape[1]
    out_p = w2.shape[1]
    grid = (b_pad // tile_b,)
    out_itemsize = jnp.dtype(out_dtype).itemsize

    flops = 2 * b_pad * (in_p * hid_p + hid_p * out_p)
    bytes_accessed = (x_p.size * 4 + w1.size * 2 + w2.size * 2
                      + b1.size * 4 + b2.size * 4
                      + b_pad * out_p * out_itemsize)

    return pl.pallas_call(
        tiny_mlp_kernel,
        out_shape=jax.ShapeDtypeStruct((b_pad, out_p), out_dtype),
        grid_spec=pltpu.PrefetchScalarGridSpec(
            num_scalar_prefetch=0,
            grid=grid,
            in_specs=[
                pl.BlockSpec((tile_b, in_p), lambda i: (i, 0)),   # x streams
                # Grid-invariant weights/biases: VMEM-resident across steps.
                pl.BlockSpec((in_p, hid_p), lambda i: (0, 0)),
                pl.BlockSpec((1, hid_p), lambda i: (0, 0)),
                pl.BlockSpec((hid_p, out_p), lambda i: (0, 0)),
                pl.BlockSpec((1, out_p), lambda i: (0, 0)),
            ],
            out_specs=pl.BlockSpec((tile_b, out_p), lambda i: (i, 0)),
        ),
        compiler_params=pltpu.CompilerParams(
            dimension_semantics=("parallel",),
            vmem_limit_bytes=_vmem_limit_bytes(
                tile_b, in_p, hid_p, out_p, out_itemsize),
        ),
        cost_estimate=pl.CostEstimate(
            flops=flops, transcendentals=0, bytes_accessed=bytes_accessed),
    )(x_p, w1, b1, w2, b2)


def tiny_model_forward(x, params, out_dtype=jnp.float32):
    """x: (B, in_dim) f32.  params: output of prepare_params()."""
    B = x.shape[0]
    out_dim = params["out_dim"]
    in_p = params["w1"].shape[0]

    b_pad, tile_b = _choose_batch_tiling(B)
    # Keep x in f32 here; the f32->bf16 cast happens inside the kernel.
    x_p = _pad_to(x.astype(jnp.float32), (b_pad, in_p))

    out = _forward_padded(x_p, params["w1"], params["b1"],
                          params["w2"], params["b2"],
                          tile_b=tile_b, out_dtype=out_dtype)
    return out[:B, :out_dim]


if __name__ == "__main__":
    in_dim, hidden_dim, out_dim = 4, 5, 2
    batch = 8

    key = jax.random.PRNGKey(0)
    kx, k1, k2, k3, k4 = jax.random.split(key, 5)

    # Parameters in PyTorch nn.Linear layout: (out, in) + (out,)
    x = jax.random.normal(kx, (batch, in_dim), dtype=jnp.float32)
    w1 = jax.random.normal(k1, (hidden_dim, in_dim), dtype=jnp.float32) * 0.5
    b1 = jax.random.normal(k2, (hidden_dim,), dtype=jnp.float32) * 0.1
    w2 = jax.random.normal(k3, (out_dim, hidden_dim), dtype=jnp.float32) * 0.5
    b2 = jax.random.normal(k4, (out_dim,), dtype=jnp.float32) * 0.1

    params = prepare_params(w1, b1, w2, b2)   # one-time, hoisted out of fwd path

    out = tiny_model_forward(x, params)
    out = jax.block_until_ready(out)

    # Reference (f32, same math as the PyTorch forward).  Kernel matmuls use
    # bf16 operands with f32 accumulation, hence bf16-level tolerance.
    ref = jnp.maximum(x @ w1.T + b1, 0.0) @ w2.T + b2
    assert out.shape == (batch, out_dim)
    assert jnp.allclose(out, ref, atol=5e-2, rtol=5e-2), (
        f"max abs err {jnp.max(jnp.abs(out - ref))}")

    print("KERNEL_OK")
</pallas_src>

<mosaic_0001>
module attributes {stable_mosaic.version = 11 : i64} {
  func.func @tiny_mlp_kernel(%arg0: i32, %arg1: memref<16x128xf32, #tpu.memory_space<vmem>>, %arg2: memref<128x128xbf16, #tpu.memory_space<vmem>>, %arg3: memref<1x128xf32, #tpu.memory_space<vmem>>, %arg4: memref<128x128xbf16, #tpu.memory_space<vmem>>, %arg5: memref<1x128xf32, #tpu.memory_space<vmem>>, %arg6: memref<16x128xf32, #tpu.memory_space<vmem>>) attributes {dimension_semantics = [#tpu.dimension_semantics<parallel>], iteration_bounds = array<i64: 1>, scalar_prefetch = 0 : i64, scratch_operands = 0 : i64, tpu.core_type = #tpu.core_type<tc>, window_params = [{transform_indices = @transform_0, window_bounds = array<i64: 16, 128>}, {pipeline_mode = #tpu.pipeline_mode<synchronous>, transform_indices = @transform_1, window_bounds = array<i64: 128, 128>}, {pipeline_mode = #tpu.pipeline_mode<synchronous>, transform_indices = @transform_2, window_bounds = array<i64: 1, 128>}, {pipeline_mode = #tpu.pipeline_mode<synchronous>, transform_indices = @transform_3, window_bounds = array<i64: 128, 128>}, {pipeline_mode = #tpu.pipeline_mode<synchronous>, transform_indices = @transform_4, window_bounds = array<i64: 1, 128>}, {transform_indices = @transform_5, window_bounds = array<i64: 16, 128>}]} {
    %c0 = arith.constant 0 : index
    %c0_0 = arith.constant 0 : index
    %0 = vector.load %arg1[%c0, %c0_0] : memref<16x128xf32, #tpu.memory_space<vmem>>, vector<16x128xf32>
    %1 = arith.truncf %0 : vector<16x128xf32> to vector<16x128xbf16>
    %c0_1 = arith.constant 0 : index
    %c0_2 = arith.constant 0 : index
    %2 = vector.load %arg2[%c0_1, %c0_2] : memref<128x128xbf16, #tpu.memory_space<vmem>>, vector<128x128xbf16>
    %cst = arith.constant dense<0.000000e+00> : vector<16x128xf32>
    %3 = tpu.matmul %1, %2, %cst {dimension_numbers = #tpu.dot_dimension_numbers<[1], [0], [0], [1], [0, 0, 1, 1], [], []>} : vector<16x128xbf16>, vector<128x128xbf16>, vector<16x128xf32> -> vector<16x128xf32>
    %c0_3 = arith.constant 0 : index
    %c0_4 = arith.constant 0 : index
    %4 = vector.load %arg3[%c0_3, %c0_4] : memref<1x128xf32, #tpu.memory_space<vmem>>, vector<1x128xf32>
    %5 = vector.broadcast %4 : vector<1x128xf32> to vector<16x128xf32>
    %6 = arith.addf %3, %5 : vector<16x128xf32>
    %cst_5 = arith.constant 0.000000e+00 : f32
    %7 = vector.broadcast %cst_5 : f32 to vector<16x128xf32>
    %8 = arith.maximumf %6, %7 : vector<16x128xf32>
    %9 = arith.truncf %8 : vector<16x128xf32> to vector<16x128xbf16>
    %c0_6 = arith.constant 0 : index
    %c0_7 = arith.constant 0 : index
    %10 = vector.load %arg4[%c0_6, %c0_7] : memref<128x128xbf16, #tpu.memory_space<vmem>>, vector<128x128xbf16>
    %cst_8 = arith.constant dense<0.000000e+00> : vector<16x128xf32>
    %11 = tpu.matmul %9, %10, %cst_8 {dimension_numbers = #tpu.dot_dimension_numbers<[1], [0], [0], [1], [0, 0, 1, 1], [], []>} : vector<16x128xbf16>, vector<128x128xbf16>, vector<16x128xf32> -> vector<16x128xf32>
    %c0_9 = arith.constant 0 : index
    %c0_10 = arith.constant 0 : index
    %12 = vector.load %arg5[%c0_9, %c0_10] : memref<1x128xf32, #tpu.memory_space<vmem>>, vector<1x128xf32>
    %13 = vector.broadcast %12 : vector<1x128xf32> to vector<16x128xf32>
    %14 = arith.addf %11, %13 : vector<16x128xf32>
    %c0_11 = arith.constant 0 : index
    %c0_12 = arith.constant 0 : index
    %15 = vector.load %arg6[%c0_11, %c0_12] : memref<16x128xf32, #tpu.memory_space<vmem>>, vector<16x128xf32>
    tpu.vector_store %arg6[%c0_11, %c0_12], %14 {strides = array<i32>} : memref<16x128xf32, #tpu.memory_space<vmem>>, vector<16x128xf32>,
    return
  }
  func.func @transform_0(%arg0: i32) -> (i32, i32) {
    %c0_i32 = arith.constant 0 : i32
    %c0_i32_0 = arith.constant 0 : i32
    return %arg0, %c0_i32 : i32, i32
  }
  func.func @transform_1(%arg0: i32) -> (i32, i32) {
    %c0_i32 = arith.constant 0 : i32
    %c0_i32_0 = arith.constant 0 : i32
    %c0_i32_1 = arith.constant 0 : i32
    return %c0_i32, %c0_i32_0 : i32, i32
  }
  func.func @transform_2(%arg0: i32) -> (i32, i32) {
    %c0_i32 = arith.constant 0 : i32
    %c0_i32_0 = arith.constant 0 : i32
    %c0_i32_1 = arith.constant 0 : i32
    return %c0_i32, %c0_i32_0 : i32, i32
  }
  func.func @transform_3(%arg0: i32) -> (i32, i32) {
    %c0_i32 = arith.constant 0 : i32
    %c0_i32_0 = arith.constant 0 : i32
    %c0_i32_1 = arith.constant 0 : i32
    return %c0_i32, %c0_i32_0 : i32, i32
  }
  func.func @transform_4(%arg0: i32) -> (i32, i32) {
    %c0_i32 = arith.constant 0 : i32
    %c0_i32_0 = arith.constant 0 : i32
    %c0_i32_1 = arith.constant 0 : i32
    return %c0_i32, %c0_i32_0 : i32, i32
  }
  func.func @transform_5(%arg0: i32) -> (i32, i32) {
    %c0_i32 = arith.constant 0 : i32
    %c0_i32_0 = arith.constant 0 : i32
    return %arg0, %c0_i32 : i32, i32
  }
}

</mosaic_0001>

<llo_original>
// kernel: _forward_padded.1
$region0: #{_forward_padded.1}
  #allocation0 [shape = 'u32[]', space=smem, size = 0x4, offset = 0x4, fixed_abs, tag = 'smem constant byte address 0x4 - core index']
  #allocation1 [shape = 'u32[144,128]{1,0:T(1,128)}', space=vmem, size = 0x12000, scoped, tag = 'internal scratch']
  %s0 = inlined_call_operand.hbm [shape: f32[16,128], index: 0, kind: input, shape index: {}]
  %s1 = inlined_call_operand.hbm [shape: bf16[128,128], index: 1, kind: input, shape index: {}]
  %s2 = inlined_call_operand.vmem [shape: f32[1,128], index: 2, kind: input, shape index: {}]
  %s3 = inlined_call_operand.hbm [shape: bf16[128,128], index: 3, kind: input, shape index: {}]
  %s4 = inlined_call_operand.vmem [shape: f32[1,128], index: 4, kind: input, shape index: {}]
  %s5 = inlined_call_operand.hbm [shape: f32[16,128], index: 5, kind: output, shape index: {}]
  %s6 = sld [smem:[#allocation0]]
  $region42: #{_forward_padded.1} parent=0
    _
  %s8 = ssub.s32 1, %s6
  %s9 = scalar_select 0, %s8, %s6
  $region1: #{_forward_padded.1} parent=0
    #allocation2 [shape = 'u8[8192]{0}', space=vmem, size = 0x2000, scoped, tag = 'input window, operand 0, single buffered']
    #allocation3 [shape = 's32[1]{0}', space=sflag, size = 0x4, scoped, tag = 'scoped memory for _forward_padded.1']
    #allocation4 [shape = 's32[1]{0}', space=sflag, size = 0x4, scoped, tag = 'scoped memory for _forward_padded.1']
    #allocation5 [shape = 'u8[32768]{0}', space=vmem, size = 0x8000, scoped, tag = 'input window, operand 1, single buffered']
    #allocation6 [shape = 's32[1]{0}', space=sflag, size = 0x4, scoped, tag = 'scoped memory for _forward_padded.1']
    #allocation7 [shape = 'u8[32768]{0}', space=vmem, size = 0x8000, scoped, tag = 'input window, operand 3, single buffered']
    #allocation8 [shape = 'u8[8192]{0}', space=vmem, size = 0x2000, scoped, tag = 'output window, operand 0, single buffered']
    %10 = vsyncpa [#allocation3], 0
    %11 = vsyncpa [#allocation6], 0
    %12 = vsyncpa [#allocation4], 0
    // Predicated region
    $region2: #{_forward_padded.1} parent=1 // pred_check
      _
    $region3: #{_forward_padded.1} parent=1 // pred_check_branch
      %14 = sbr.rel (0) target = $region5
    $region4: #{_forward_padded.1} parent=1 // pred_region
      %s16 = ssub.s32 256, 256
      %17 = vsyncadd [#allocation3], %s16
      %s18 = sshll.u32 [#allocation2], 4
      %s19 = int_to_ptr.vmem [resolvable:$true] %s18
      %24 = dma.hbm_to_vmem [thread:$0]  %s0, 256, %s19, [#allocation3], 128, 128, 8
    $region5: #{_forward_padded.1} parent=1 // pred_fallthru
      _
    // Predicated region
    $region6: #{_forward_padded.1} parent=1 // pred_check
      _
    $region7: #{_forward_padded.1} parent=1 // pred_check_branch
      %26 = sbr.rel (0) target = $region9
    $region8: #{_forward_padded.1} parent=1 // pred_region
      %s28 = ssub.s32 1024, 1024
      %29 = vsyncadd [#allocation6], %s28
      %s30 = sshll.u32 [#allocation5], 4
      %s31 = int_to_ptr.vmem [resolvable:$true] %s30
      %36 = dma.hbm_to_vmem [thread:$0]  %s1, 1024, %s31, [#allocation6], 64, 64, 4
    $region9: #{_forward_padded.1} parent=1 // pred_fallthru
      _
    // Predicated region
    $region10: #{_forward_padded.1} parent=1 // pred_check
      _
    $region11: #{_forward_padded.1} parent=1 // pred_check_branch
      %38 = sbr.rel (0) target = $region13
    $region12: #{_forward_padded.1} parent=1 // pred_region
      _
    $region13: #{_forward_padded.1} parent=1 // pred_fallthru
      _
    // Predicated region
    $region14: #{_forward_padded.1} parent=1 // pred_check
      _
    $region15: #{_forward_padded.1} parent=1 // pred_check_branch
      %40 = sbr.rel (0) target = $region17
    $region16: #{_forward_padded.1} parent=1 // pred_region
      %s42 = ssub.s32 1024, 1024
      %43 = vsyncadd [#allocation6], %s42
      %s44 = sshll.u32 [#allocation7], 4
      %s45 = int_to_ptr.vmem [resolvable:$true] %s44
      %50 = dma.hbm_to_vmem [thread:$0]  %s3, 1024, %s45, [#allocation6], 64, 64, 4
    $region17: #{_forward_padded.1} parent=1 // pred_fallthru
      _
    // Predicated region
    $region18: #{_forward_padded.1} parent=1 // pred_check
      _
    $region19: #{_forward_padded.1} parent=1 // pred_check_branch
      %52 = sbr.rel (0) target = $region21
    $region20: #{_forward_padded.1} parent=1 // pred_region
      _
    $region21: #{_forward_padded.1} parent=1 // pred_fallthru
      _
    // Predicated region
    $region22: #{_forward_padded.1} parent=1 // pred_check
      _
    $region23: #{_forward_padded.1} parent=1 // pred_check_branch
      %54 = sbr.rel (0) target = $region25
    $region24: #{_forward_padded.1} parent=1 // pred_region
      %55 = dma.done [#allocation3], 256
    $region25: #{_forward_padded.1} parent=1 // pred_fallthru
      _
    // Predicated region
    $region26: #{_forward_padded.1} parent=1 // pred_check
      _
    $region27: #{_forward_padded.1} parent=1 // pred_check_branch
      %57 = sbr.rel (0) target = $region29
    $region28: #{_forward_padded.1} parent=1 // pred_region
      %58 = dma.done [#allocation6], 1024
    $region29: #{_forward_padded.1} parent=1 // pred_fallthru
      _
    // Predicated region
    $region30: #{_forward_padded.1} parent=1 // pred_check
      _
    $region31: #{_forward_padded.1} parent=1 // pred_check_branch
      %60 = sbr.rel (0) target = $region33
    $region32: #{_forward_padded.1} parent=1 // pred_region
      %61 = dma.done [#allocation6], 1024
    $region33: #{_forward_padded.1} parent=1 // pred_fallthru
      _
    %v63 = vld [vmem:[#allocation2] sm:$0xff]
    %v64 = vld [vmem:[#allocation2 + $0x8] sm:$0xff]
    %v65 = vpack.c.bf16 %v64, %v63
    %v66 = vld [vmem:[#allocation5] sm:$0xf]
    %v67 = vld [vmem:[#allocation5 + $0x4] sm:$0xf]
    %v68 = vld [vmem:[#allocation5 + $0x8] sm:$0xf]
    %v69 = vld [vmem:[#allocation5 + $0xc] sm:$0xf]
    %v70 = vld [vmem:[#allocation5 + $0x10] sm:$0xf]
    %v71 = vld [vmem:[#allocation5 + $0x14] sm:$0xf]
    %v72 = vld [vmem:[#allocation5 + $0x18] sm:$0xf]
    %v73 = vld [vmem:[#allocation5 + $0x1c] sm:$0xf]
    %v74 = vld [vmem:[#allocation5 + $0x20] sm:$0xf]
    %v75 = vld [vmem:[#allocation5 + $0x24] sm:$0xf]
    %v76 = vld [vmem:[#allocation5 + $0x28] sm:$0xf]
    %v77 = vld [vmem:[#allocation5 + $0x2c] sm:$0xf]
    %v78 = vld [vmem:[#allocation5 + $0x30] sm:$0xf]
    %v79 = vld [vmem:[#allocation5 + $0x34] sm:$0xf]
    %v80 = vld [vmem:[#allocation5 + $0x38] sm:$0xf]
    %v81 = vld [vmem:[#allocation5 + $0x3c] sm:$0xf]
    %v82 = vld [vmem:[%s2] sm:$0x1]
    %v84 = vlaneseq
    %v85 = vshrl.u32 %v84, 7
    %v86 = vsub.s32 0, %v85
    %v87 = vrot.slane %v82, %v86
    %v105 = vunpack.c.l.b16 %v66
    %v106 = vunpack.c.l.b16 %v67
    %v107 = vunpack.c.l.b16 %v68
    %v108 = vunpack.c.l.b16 %v69
    %v109 = vunpack.c.l.b16 %v70
    %v110 = vunpack.c.l.b16 %v71
    %v111 = vunpack.c.l.b16 %v72
    %v112 = vunpack.c.l.b16 %v73
    %v113 = vunpack.c.l.b16 %v74
    %v114 = vunpack.c.l.b16 %v75
    %v115 = vunpack.c.l.b16 %v76
    %v116 = vunpack.c.l.b16 %v77
    %v117 = vunpack.c.l.b16 %v78
    %v118 = vunpack.c.l.b16 %v79
    %v119 = vunpack.c.l.b16 %v80
    %v120 = vunpack.c.l.b16 %v81
    %v121 = vpack.c.b16 %v106, %v105
    %v122 = vpack.c.b16 %v108, %v107
    %v123 = vpack.c.b16 %v110, %v109
    %v124 = vpack.c.b16 %v112, %v111
    %v125 = vpack.c.b16 %v114, %v113
    %v126 = vpack.c.b16 %v116, %v115
    %v127 = vpack.c.b16 %v118, %v117
    %v128 = vpack.c.b16 %v120, %v119
    %137 = vmatprep.subr.bf16.mxu0 0
    %138 = vmatpush1.bf16.msra.mxu0 %v121
    %139 = vmatprep.subr.bf16.mxu0 0
    %140 = vmatpush1.bf16.msra.mxu0 %v122
    %141 = vmatprep.subr.bf16.mxu0 0
    %142 = vmatpush1.bf16.msra.mxu0 %v123
    %143 = vmatprep.subr.bf16.mxu0 0
    %144 = vmatpush1.bf16.msra.mxu0 %v124
    %145 = vmatprep.subr.bf16.mxu0 0
    %146 = vmatpush1.bf16.msra.mxu0 %v125
    %147 = vmatprep.subr.bf16.mxu0 0
    %148 = vmatpush1.bf16.msra.mxu0 %v126
    %149 = vmatprep.subr.bf16.mxu0 0
    %150 = vmatpush1.bf16.msra.mxu0 %v127
    %151 = vmatprep.subr.bf16.mxu0 0
    %152 = vmatpush1.bf16.msra.mxu0 %v128
    %153 = vmatprep.subr.bf16.mxu0 0
    %154 = vmatpush1.bf16.msra.mxu0 0
    %155 = vmatprep.subr.bf16.mxu0 0
    %156 = vmatpush1.bf16.msra.mxu0 0
    %157 = vmatprep.subr.bf16.mxu0 0
    %158 = vmatpush1.bf16.msra.mxu0 0
    %159 = vmatprep.subr.bf16.mxu0 0
    %160 = vmatpush1.bf16.msra.mxu0 0
    %161 = vmatprep.subr.bf16.mxu0 0
    %162 = vmatpush1.bf16.msra.mxu0 0
    %163 = vmatprep.subr.bf16.mxu0 0
    %164 = vmatpush1.bf16.msra.mxu0 0
    %165 = vmatprep.subr.bf16.mxu0 0
    %166 = vmatpush1.bf16.msra.mxu0 0
    %167 = vmatprep.subr.bf16.mxu0 0
    %168 = vmatpush1.bf16.msra.mxu0 0
    %169 = vmatprep.mubr.bf16.mxu0 0
    %170 = vmatmul.mubr.bf16.gmra.mrb[0].mxu0 %v65
    %v171 = vpop.f32.mrb[0].mxu0
    %v172 = vadd.f32 %v87, %v171
    %v173 = vpop.f32.mrb[0].mxu0
    %v174 = vpop.f32.mrb[0].mxu0
    %v175 = vadd.f32 %v87, %v174
    %v176 = vpop.f32.mrb[0].mxu0
    %177 = vdwg.mxu0
    %v178 = vmax.f32 %v172, 0.0
    %v179 = vmax.f32 %v175, 0.0
    %v180 = vpack.c.bf16 %v179, %v178
    %v181 = vld [vmem:[#allocation7] sm:$0xf]
    %v182 = vld [vmem:[#allocation7 + $0x4] sm:$0xf]
    %v183 = vld [vmem:[#allocation7 + $0x8] sm:$0xf]
    %v184 = vld [vmem:[#allocation7 + $0xc] sm:$0xf]
    %v185 = vld [vmem:[#allocation7 + $0x10] sm:$0xf]
    %v186 = vld [vmem:[#allocation7 + $0x14] sm:$0xf]
    %v187 = vld [vmem:[#allocation7 + $0x18] sm:$0xf]
    %v188 = vld [vmem:[#allocation7 + $0x1c] sm:$0xf]
    %v189 = vld [vmem:[#allocation7 + $0x20] sm:$0xf]
    %v190 = vld [vmem:[#allocation7 + $0x24] sm:$0xf]
    %v191 = vld [vmem:[#allocation7 + $0x28] sm:$0xf]
    %v192 = vld [vmem:[#allocation7 + $0x2c] sm:$0xf]
    %v193 = vld [vmem:[#allocation7 + $0x30] sm:$0xf]
    %v194 = vld [vmem:[#allocation7 + $0x34] sm:$0xf]
    %v195 = vld [vmem:[#allocation7 + $0x38] sm:$0xf]
    %v196 = vld [vmem:[#allocation7 + $0x3c] sm:$0xf]
    %v197 = vld [vmem:[%s4] sm:$0x1]
    %v199 = vlaneseq
    %v200 = vshrl.u32 %v199, 7
    %v201 = vsub.s32 0, %v200
    %v202 = vrot.slane %v197, %v201
    %v220 = vunpack.c.l.b16 %v181
    %v221 = vunpack.c.l.b16 %v182
    %v222 = vunpack.c.l.b16 %v183
    %v223 = vunpack.c.l.b16 %v184
    %v224 = vunpack.c.l.b16 %v185
    %v225 = vunpack.c.l.b16 %v186
    %v226 = vunpack.c.l.b16 %v187
    %v227 = vunpack.c.l.b16 %v188
    %v228 = vunpack.c.l.b16 %v189
    %v229 = vunpack.c.l.b16 %v190
    %v230 = vunpack.c.l.b16 %v191
    %v231 = vunpack.c.l.b16 %v192
    %v232 = vunpack.c.l.b16 %v193
    %v233 = vunpack.c.l.b16 %v194
    %v234 = vunpack.c.l.b16 %v195
    %v235 = vunpack.c.l.b16 %v196
    %v236 = vpack.c.b16 %v221, %v220
    %v237 = vpack.c.b16 %v223, %v222
    %v238 = vpack.c.b16 %v225, %v224
    %v239 = vpack.c.b16 %v227, %v226
    %v240 = vpack.c.b16 %v229, %v228
    %v241 = vpack.c.b16 %v231, %v230
    %v242 = vpack.c.b16 %v233, %v232
    %v243 = vpack.c.b16 %v235, %v234
    %252 = vmatprep.subr.bf16.mxu0 0
    %253 = vmatpush1.bf16.msra.mxu0 %v236
    %254 = vmatprep.subr.bf16.mxu0 0
    %255 = vmatpush1.bf16.msra.mxu0 %v237
    %256 = vmatprep.subr.bf16.mxu0 0
    %257 = vmatpush1.bf16.msra.mxu0 %v238
    %258 = vmatprep.subr.bf16.mxu0 0
    %259 = vmatpush1.bf16.msra.mxu0 %v239
    %260 = vmatprep.subr.bf16.mxu0 0
    %261 = vmatpush1.bf16.msra.mxu0 %v240
    %262 = vmatprep.subr.bf16.mxu0 0
    %263 = vmatpush1.bf16.msra.mxu0 %v241
    %264 = vmatprep.subr.bf16.mxu0 0
    %265 = vmatpush1.bf16.msra.mxu0 %v242
    %266 = vmatprep.subr.bf16.mxu0 0
    %267 = vmatpush1.bf16.msra.mxu0 %v243
    %268 = vmatprep.subr.bf16.mxu0 0
    %269 = vmatpush1.bf16.msra.mxu0 0
    %270 = vmatprep.subr.bf16.mxu0 0
    %271 = vmatpush1.bf16.msra.mxu0 0
    %272 = vmatprep.subr.bf16.mxu0 0
    %273 = vmatpush1.bf16.msra.mxu0 0
    %274 = vmatprep.subr.bf16.mxu0 0
    %275 = vmatpush1.bf16.msra.mxu0 0
    %276 = vmatprep.subr.bf16.mxu0 0
    %277 = vmatpush1.bf16.msra.mxu0 0
    %278 = vmatprep.subr.bf16.mxu0 0
    %279 = vmatpush1.bf16.msra.mxu0 0
    %280 = vmatprep.subr.bf16.mxu0 0
    %281 = vmatpush1.bf16.msra.mxu0 0
    %282 = vmatprep.subr.bf16.mxu0 0
    %283 = vmatpush1.bf16.msra.mxu0 0
    %284 = vmatprep.mubr.bf16.mxu0 0
    %285 = vmatmul.mubr.bf16.gmra.mrb[0].mxu0 %v180
    %v286 = vpop.f32.mrb[0].mxu0
    %v287 = vadd.f32 %v202, %v286
    %v288 = vpop.f32.mrb[0].mxu0
    %v289 = vpop.f32.mrb[0].mxu0
    %v290 = vadd.f32 %v202, %v289
    %v291 = vpop.f32.mrb[0].mxu0
    %292 = vdwg.mxu0
    %293 = vst [vmem:[#allocation8] sm:$0xff] %v287
    %294 = vst [vmem:[#allocation8 + $0x8] sm:$0xff] %v290
    // Predicated region
    $region34: #{_forward_padded.1} parent=1 // pred_check
      _
    $region35: #{_forward_padded.1} parent=1 // pred_check_branch
      %296 = sbr.rel (0) target = $region37
    $region36: #{_forward_padded.1} parent=1 // pred_region
      %s298 = ssub.s32 256, 256
      %299 = vsyncadd [#allocation4], %s298
      %s300 = sshll.u32 [#allocation8], 4
      %s301 = int_to_ptr.vmem [resolvable:$true] %s300
      %306 = dma.vmem_to_hbm [thread:$0]  %s301, 256, %s5, [#allocation4], 128, 128, 8
    $region37: #{_forward_padded.1} parent=1 // pred_fallthru
      _
    // Predicated region
    $region38: #{_forward_padded.1} parent=1 // pred_check
      _
    $region39: #{_forward_padded.1} parent=1 // pred_check_branch
      %308 = sbr.rel (0) target = $region41
    $region40: #{_forward_padded.1} parent=1 // pred_region
      %309 = dma.done [#allocation4], 256
    $region41: #{_forward_padded.1} parent=1 // pred_fallthru
      _
    %310 = vsyncpa [#allocation3], 1
    %311 = vsyncpa [#allocation6], 1
    %312 = vsyncpa [#allocation4], 1

</llo_original>
